<compile_context>
chip_gen: v7x
topology: tpu7x:2x2x1
jax: 0.10.0
libtpu: 0.0.40
codegen_flags: <defaults>
</compile_context>

<pallas_src>
import functools

import jax
import jax.numpy as jnp
import numpy as np
from jax.experimental import pallas as pl
from jax.experimental.pallas import tpu as pltpu


# ----------------------------------------------------------------------------
# Host-side glue (numpy): interpolation matrices, crop band, output size.
# ----------------------------------------------------------------------------
def _bilinear_matrix(in_size: int, out_size: int) -> np.ndarray:
    """M of shape (out_size, in_size) s.t. resized = M @ signal.

    PyTorch bilinear, align_corners=False, antialias=False.
    """
    scale = in_size / out_size
    i = np.arange(out_size, dtype=np.float64)
    src = np.clip((i + 0.5) * scale - 0.5, 0.0, in_size - 1)
    lo = np.floor(src).astype(np.int64)
    hi = np.minimum(lo + 1, in_size - 1)
    w_hi = (src - lo).astype(np.float32)
    w_lo = (1.0 - w_hi).astype(np.float32)
    mat = np.zeros((out_size, in_size), np.float32)
    rows = np.arange(out_size)
    np.add.at(mat, (rows, lo), w_lo)
    np.add.at(mat, (rows, hi), w_hi)
    return mat


def _resize_output_size(h: int, w: int, size: int):
    # torchvision F.resize with a single int: smaller edge -> size, keep aspect
    # (long edge truncated, matching torchvision's int() behavior).
    if h <= w:
        return size, int(size * w / h)
    return int(size * h / w), size


def _nonzero_col_band(mat: np.ndarray):
    """[b0, b1): contiguous range of source columns with any nonzero weight."""
    used = np.nonzero(np.any(mat != 0.0, axis=0))[0]
    return int(used[0]), int(used[-1]) + 1


# ----------------------------------------------------------------------------
# Pallas kernel: one batch element, all channels.
# ----------------------------------------------------------------------------
def _preprocess_kernel(img_ref, rmat_ref, cmat_ref, out_ref, *,
                       h0, w0, scale, bias, input_is_u8):
    """out[c] = (R @ img[c][h0:h0+bh, w0:w0+bw] @ C) * scale[c] - bias[c]."""
    C, crop_h, crop_w = out_ref.shape
    bh = rmat_ref.shape[1]
    bw = cmat_ref.shape[0]
    rmat = rmat_ref[...]                                   # (crop_h, bh)
    cmat = cmat_ref[...]                                   # (bw, crop_w)

    # Row interpolation: C small per-channel dots, stacked along M so the
    # column interpolation below is ONE fat matmul (M = C*crop_h).
    parts = []
    for c in range(C):
        plane = img_ref[c].astype(jnp.float32)             # (H, W)
        if input_is_u8:
            # uint8 bytes were bitcast to int8 on the host so the DMA moves
            # 1 byte/pixel; undo the reinterpretation (x<0 means original x+256).
            plane = jnp.where(plane < 0.0, plane + 256.0, plane)
        band = plane[h0:h0 + bh, w0:w0 + bw]               # (bh, bw)
        parts.append(jnp.dot(rmat, band, preferred_element_type=jnp.float32))
    tmp = jnp.concatenate(parts, axis=0)                    # (C*crop_h, bw)
    res = jnp.dot(tmp, cmat, preferred_element_type=jnp.float32)  # (C*crop_h, crop_w)

    # Fused normalize: (x[/255] - mean) / std == x*scale - bias, scale/bias static.
    for c in range(C):
        out_ref[c] = res[c * crop_h:(c + 1) * crop_h, :] * scale[c] - bias[c]


# ----------------------------------------------------------------------------
# Wrapper.
# ----------------------------------------------------------------------------
def image_classification_preprocess(img,
                                    *,
                                    crop_size: int,
                                    resize_size: int = 256,
                                    mean=(0.485, 0.456, 0.406),
                                    std=(0.229, 0.224, 0.225)) -> jnp.ndarray:
    """img: (B,C,H,W) or (C,H,W); float in [0,1] or uint8.  Returns float32."""
    if img.ndim == 3:
        return image_classification_preprocess(
            img[None], crop_size=crop_size, resize_size=resize_size,
            mean=mean, std=std)[0]
    assert img.ndim == 4, "expected (B, C, H, W) or (C, H, W)"
    B, C, H, W = img.shape

    # convert_image_dtype: uint8 -> /255 (folded into `scale` below), float no-op.
    if img.dtype == jnp.uint8:
        input_is_u8 = True
        img = jax.lax.bitcast_convert_type(img, jnp.int8)   # keep 1-byte HBM reads
    else:
        # TODO(synk): other integer input dtypes of convert_image_dtype not handled.
        input_is_u8 = False
        img = img.astype(jnp.float32)

    new_h, new_w = _resize_output_size(H, W, resize_size)
    assert crop_size <= new_h and crop_size <= new_w, \
        "crop larger than resized image"  # TODO(synk): torchvision padding path not implemented
    top = int(round((new_h - crop_size) / 2.0))
    left = int(round((new_w - crop_size) / 2.0))

    # Resize + center-crop folded into the interpolation matrices, then
    # restricted to the source band with nonzero weight (exact: dropped
    # rows/cols have all-zero weights).
    # TODO(synk): antialias='warn' treated as antialias=False (legacy tensor path).
    rfull = _bilinear_matrix(H, new_h)[top:top + crop_size]      # (crop, H)
    cfull = _bilinear_matrix(W, new_w)[left:left + crop_size]    # (crop, W)
    h0, h1 = _nonzero_col_band(rfull)
    w0, w1 = _nonzero_col_band(cfull)
    bh, bw = h1 - h0, w1 - w0
    rmat = jnp.asarray(rfull[:, h0:h1])                          # (crop, bh)
    cmat = jnp.asarray(cfull[:, w0:w1].T)                        # (bw, crop)

    mean = tuple(float(m) for m in mean)
    std = tuple(float(s) for s in std)
    if len(mean) == 1:
        mean = mean * C
    if len(std) == 1:
        std = std * C
    assert len(mean) == C and len(std) == C
    u8_scale = (1.0 / 255.0) if input_is_u8 else 1.0
    scale = tuple(u8_scale / s for s in std)                 # multiply, no divide
    bias = tuple(m / s for m, s in zip(mean, std))

    kernel = functools.partial(_preprocess_kernel, h0=h0, w0=w0,
                               scale=scale, bias=bias, input_is_u8=input_is_u8)

    # VMEM budget: double-buffered img/out blocks + matrices + intermediates.
    img_bytes = C * H * W * (1 if input_is_u8 else 4)
    out_bytes = C * crop_size * crop_size * 4
    mat_bytes = (crop_size * bh + bw * crop_size) * 4
    interm_bytes = (2 * C * crop_size * bw + C * crop_size * crop_size) * 4
    vmem_needed = 2 * img_bytes + 2 * out_bytes + 2 * mat_bytes + interm_bytes + (1 << 20)
    extra = {}
    if vmem_needed > (32 << 20):
        # TODO(synk): for very large frames (v7x has only 64 MiB VMEM) tile H
        # with a reduction grid axis + accumulator instead of only raising the limit.
        extra["vmem_limit_bytes"] = int(min(vmem_needed * 5 // 4, 100 << 20))

    return pl.pallas_call(
        kernel,
        out_shape=jax.ShapeDtypeStruct((B, C, crop_size, crop_size), jnp.float32),
        grid=(B,),
        in_specs=[
            # Whole (C, H, W) image per grid step; channels folded into the block.
            pl.BlockSpec((pl.Squeezed(), C, H, W), lambda b: (b, 0, 0, 0)),
            # Interpolation matrices: constant block index -> fetched once, stay resident.
            pl.BlockSpec((crop_size, bh), lambda b: (0, 0)),
            pl.BlockSpec((bw, crop_size), lambda b: (0, 0)),
        ],
        out_specs=pl.BlockSpec((pl.Squeezed(), C, crop_size, crop_size),
                               lambda b: (b, 0, 0, 0)),
        compiler_params=pltpu.CompilerParams(
            dimension_semantics=("parallel",), **extra),
    )(img, rmat, cmat)


# ----------------------------------------------------------------------------
# Pure-JAX reference (same math) for a sanity check.
# ----------------------------------------------------------------------------
def _reference(img_f32, *, crop_size, resize_size, mean, std):
    B, C, H, W = img_f32.shape
    new_h, new_w = _resize_output_size(H, W, resize_size)
    top = int(round((new_h - crop_size) / 2.0))
    left = int(round((new_w - crop_size) / 2.0))
    rmat = jnp.asarray(_bilinear_matrix(H, new_h)[top:top + crop_size])
    cmat = jnp.asarray(_bilinear_matrix(W, new_w)[left:left + crop_size].T)
    out = jnp.einsum("oh,bchw,wk->bcok", rmat, img_f32.astype(jnp.float32), cmat)
    m = jnp.asarray(mean, jnp.float32).reshape(1, C, 1, 1)
    s = jnp.asarray(std, jnp.float32).reshape(1, C, 1, 1)
    return (out - m) / s


if __name__ == "__main__":
    key = jax.random.PRNGKey(0)
    kf, ku = jax.random.split(key)
    B, C, H, W = 2, 3, 16, 20          # small NCHW batch
    crop_size, resize_size = 16, 24
    mean = (0.485, 0.456, 0.406)
    std = (0.229, 0.224, 0.225)

    # Float path (values already in [0, 1]).
    img_f = jax.random.uniform(kf, (B, C, H, W), dtype=jnp.float32)
    out_f = image_classification_preprocess(
        img_f, crop_size=crop_size, resize_size=resize_size, mean=mean, std=std)
    out_f = jax.block_until_ready(out_f)
    ref_f = _reference(img_f, crop_size=crop_size, resize_size=resize_size,
                       mean=mean, std=std)
    assert out_f.shape == (B, C, crop_size, crop_size)
    assert jnp.allclose(out_f, ref_f, atol=2e-4, rtol=2e-4), \
        float(jnp.max(jnp.abs(out_f - ref_f)))

    # uint8 path (convert_image_dtype's /255 folded into the kernel, 1-byte DMA).
    img_u8 = jax.random.randint(ku, (B, C, H, W), 0, 256,
                                dtype=jnp.int32).astype(jnp.uint8)
    out_u = image_classification_preprocess(
        img_u8, crop_size=crop_size, resize_size=resize_size, mean=mean, std=std)
    out_u = jax.block_until_ready(out_u)
    ref_u = _reference(img_u8.astype(jnp.float32) / 255.0, crop_size=crop_size,
                       resize_size=resize_size, mean=mean, std=std)
    assert jnp.allclose(out_u, ref_u, atol=1e-3, rtol=1e-3), \
        float(jnp.max(jnp.abs(out_u - ref_u)))

    print("KERNEL_OK")
</pallas_src>

<mosaic_0001>
module attributes {stable_mosaic.version = 11 : i64} {
  func.func @_preprocess_kernel(%arg0: i32, %arg1: memref<1x3x16x20xf32, #tpu.memory_space<vmem>>, %arg2: memref<16x12xf32, #tpu.memory_space<vmem>>, %arg3: memref<12x16xf32, #tpu.memory_space<vmem>>, %arg4: memref<1x3x16x16xf32, #tpu.memory_space<vmem>>) attributes {dimension_semantics = [#tpu.dimension_semantics<parallel>], iteration_bounds = array<i64: 2>, scalar_prefetch = 0 : i64, scratch_operands = 0 : i64, tpu.core_type = #tpu.core_type<tc>, window_params = [{transform_indices = @transform_0, window_bounds = array<i64: 1, 3, 16, 20>}, {pipeline_mode = #tpu.pipeline_mode<synchronous>, transform_indices = @transform_1, window_bounds = array<i64: 16, 12>}, {pipeline_mode = #tpu.pipeline_mode<synchronous>, transform_indices = @transform_2, window_bounds = array<i64: 12, 16>}, {transform_indices = @transform_3, window_bounds = array<i64: 1, 3, 16, 16>}]} {
    %c0 = arith.constant 0 : index
    %c0_0 = arith.constant 0 : index
    %0 = vector.load %arg2[%c0, %c0_0] : memref<16x12xf32, #tpu.memory_space<vmem>>, vector<16x12xf32>
    %c0_1 = arith.constant 0 : index
    %c0_2 = arith.constant 0 : index
    %1 = vector.load %arg3[%c0_1, %c0_2] : memref<12x16xf32, #tpu.memory_space<vmem>>, vector<12x16xf32>
    %c0_3 = arith.constant 0 : index
    %c0_4 = arith.constant 0 : index
    %c0_5 = arith.constant 0 : index
    %c0_6 = arith.constant 0 : index
    %2 = vector.load %arg1[%c0_3, %c0_4, %c0_5, %c0_6] : memref<1x3x16x20xf32, #tpu.memory_space<vmem>>, vector<1x1x16x20xf32>
    %3 = vector.shape_cast %2 : vector<1x1x16x20xf32> to vector<16x20xf32>
    %4 = vector.extract_strided_slice %3 {offsets = [2, 4], sizes = [12, 12], strides = [1, 1]} : vector<16x20xf32> to vector<12x12xf32>
    %cst = arith.constant dense<0.000000e+00> : vector<16x12xf32>
    %5 = tpu.matmul %0, %4, %cst {dimension_numbers = #tpu.dot_dimension_numbers<[1], [0], [0], [1], [0, 0, 1, 1], [], []>} : vector<16x12xf32>, vector<12x12xf32>, vector<16x12xf32> -> vector<16x12xf32>
    %c0_7 = arith.constant 0 : index
    %c1 = arith.constant 1 : index
    %c0_8 = arith.constant 0 : index
    %c0_9 = arith.constant 0 : index
    %6 = vector.load %arg1[%c0_7, %c1, %c0_8, %c0_9] : memref<1x3x16x20xf32, #tpu.memory_space<vmem>>, vector<1x1x16x20xf32>
    %7 = vector.shape_cast %6 : vector<1x1x16x20xf32> to vector<16x20xf32>
    %8 = vector.extract_strided_slice %7 {offsets = [2, 4], sizes = [12, 12], strides = [1, 1]} : vector<16x20xf32> to vector<12x12xf32>
    %cst_10 = arith.constant dense<0.000000e+00> : vector<16x12xf32>
    %9 = tpu.matmul %0, %8, %cst_10 {dimension_numbers = #tpu.dot_dimension_numbers<[1], [0], [0], [1], [0, 0, 1, 1], [], []>} : vector<16x12xf32>, vector<12x12xf32>, vector<16x12xf32> -> vector<16x12xf32>
    %c0_11 = arith.constant 0 : index
    %c2 = arith.constant 2 : index
    %c0_12 = arith.constant 0 : index
    %c0_13 = arith.constant 0 : index
    %10 = vector.load %arg1[%c0_11, %c2, %c0_12, %c0_13] : memref<1x3x16x20xf32, #tpu.memory_space<vmem>>, vector<1x1x16x20xf32>
    %11 = vector.shape_cast %10 : vector<1x1x16x20xf32> to vector<16x20xf32>
    %12 = vector.extract_strided_slice %11 {offsets = [2, 4], sizes = [12, 12], strides = [1, 1]} : vector<16x20xf32> to vector<12x12xf32>
    %cst_14 = arith.constant dense<0.000000e+00> : vector<16x12xf32>
    %13 = tpu.matmul %0, %12, %cst_14 {dimension_numbers = #tpu.dot_dimension_numbers<[1], [0], [0], [1], [0, 0, 1, 1], [], []>} : vector<16x12xf32>, vector<12x12xf32>, vector<16x12xf32> -> vector<16x12xf32>
    %14 = tpu.concatenate %5, %9, %13 in 0 : vector<16x12xf32>, vector<16x12xf32>, vector<16x12xf32> -> vector<48x12xf32>
    %cst_15 = arith.constant dense<0.000000e+00> : vector<48x16xf32>
    %15 = tpu.matmul %14, %1, %cst_15 {dimension_numbers = #tpu.dot_dimension_numbers<[1], [0], [0], [1], [0, 0, 1, 1], [], []>} : vector<48x12xf32>, vector<12x16xf32>, vector<48x16xf32> -> vector<48x16xf32>
    %16 = vector.extract_strided_slice %15 {offsets = [0, 0], sizes = [16, 16], strides = [1, 1]} : vector<48x16xf32> to vector<16x16xf32>
    %cst_16 = arith.constant 4.36681223 : f32
    %17 = vector.broadcast %cst_16 : f32 to vector<16x16xf32>
    %18 = arith.mulf %16, %17 : vector<16x16xf32>
    %cst_17 = arith.constant 2.11790395 : f32
    %19 = vector.broadcast %cst_17 : f32 to vector<16x16xf32>
    %20 = arith.subf %18, %19 : vector<16x16xf32>
    %c0_18 = arith.constant 0 : index
    %c0_19 = arith.constant 0 : index
    %c0_20 = arith.constant 0 : index
    %c0_21 = arith.constant 0 : index
    %21 = vector.load %arg4[%c0_18, %c0_19, %c0_20, %c0_21] : memref<1x3x16x16xf32, #tpu.memory_space<vmem>>, vector<1x1x16x16xf32>
    %22 = vector.shape_cast %21 : vector<1x1x16x16xf32> to vector<16x16xf32>
    %23 = vector.shape_cast %20 : vector<16x16xf32> to vector<1x1x16x16xf32>
    tpu.vector_store %arg4[%c0_18, %c0_19, %c0_20, %c0_21], %23 {strides = array<i32>} : memref<1x3x16x16xf32, #tpu.memory_space<vmem>>, vector<1x1x16x16xf32>,
    %24 = vector.extract_strided_slice %15 {offsets = [16, 0], sizes = [16, 16], strides = [1, 1]} : vector<48x16xf32> to vector<16x16xf32>
    %cst_22 = arith.constant 4.46428585 : f32
    %25 = vector.broadcast %cst_22 : f32 to vector<16x16xf32>
    %26 = arith.mulf %24, %25 : vector<16x16xf32>
    %cst_23 = arith.constant 2.03571439 : f32
    %27 = vector.broadcast %cst_23 : f32 to vector<16x16xf32>
    %28 = arith.subf %26, %27 : vector<16x16xf32>
    %c0_24 = arith.constant 0 : index
    %c1_25 = arith.constant 1 : index
    %c0_26 = arith.constant 0 : index
    %c0_27 = arith.constant 0 : index
    %29 = vector.load %arg4[%c0_24, %c1_25, %c0_26, %c0_27] : memref<1x3x16x16xf32, #tpu.memory_space<vmem>>, vector<1x1x16x16xf32>
    %30 = vector.shape_cast %29 : vector<1x1x16x16xf32> to vector<16x16xf32>
    %31 = vector.shape_cast %28 : vector<16x16xf32> to vector<1x1x16x16xf32>
    tpu.vector_store %arg4[%c0_24, %c1_25, %c0_26, %c0_27], %31 {strides = array<i32>} : memref<1x3x16x16xf32, #tpu.memory_space<vmem>>, vector<1x1x16x16xf32>,
    %32 = vector.extract_strided_slice %15 {offsets = [32, 0], sizes = [16, 16], strides = [1, 1]} : vector<48x16xf32> to vector<16x16xf32>
    %cst_28 = arith.constant 4.44444466 : f32
    %33 = vector.broadcast %cst_28 : f32 to vector<16x16xf32>
    %34 = arith.mulf %32, %33 : vector<16x16xf32>
    %cst_29 = arith.constant 1.80444443 : f32
    %35 = vector.broadcast %cst_29 : f32 to vector<16x16xf32>
    %36 = arith.subf %34, %35 : vector<16x16xf32>
    %c0_30 = arith.constant 0 : index
    %c2_31 = arith.constant 2 : index
    %c0_32 = arith.constant 0 : index
    %c0_33 = arith.constant 0 : index
    %37 = vector.load %arg4[%c0_30, %c2_31, %c0_32, %c0_33] : memref<1x3x16x16xf32, #tpu.memory_space<vmem>>, vector<1x1x16x16xf32>
    %38 = vector.shape_cast %37 : vector<1x1x16x16xf32> to vector<16x16xf32>
    %39 = vector.shape_cast %36 : vector<16x16xf32> to vector<1x1x16x16xf32>
    tpu.vector_store %arg4[%c0_30, %c2_31, %c0_32, %c0_33], %39 {strides = array<i32>} : memref<1x3x16x16xf32, #tpu.memory_space<vmem>>, vector<1x1x16x16xf32>,
    return
  }
  func.func @transform_0(%arg0: i32) -> (i32, i32, i32, i32) {
    %c0_i32 = arith.constant 0 : i32
    %c0_i32_0 = arith.constant 0 : i32
    %c0_i32_1 = arith.constant 0 : i32
    %c0_i32_2 = arith.constant 0 : i32
    return %arg0, %c0_i32, %c0_i32_0, %c0_i32_1 : i32, i32, i32, i32
  }
  func.func @transform_1(%arg0: i32) -> (i32, i32) {
    %c0_i32 = arith.constant 0 : i32
    %c0_i32_0 = arith.constant 0 : i32
    %c0_i32_1 = arith.constant 0 : i32
    return %c0_i32, %c0_i32_0 : i32, i32
  }
  func.func @transform_2(%arg0: i32) -> (i32, i32) {
    %c0_i32 = arith.constant 0 : i32
    %c0_i32_0 = arith.constant 0 : i32
    %c0_i32_1 = arith.constant 0 : i32
    return %c0_i32, %c0_i32_0 : i32, i32
  }
  func.func @transform_3(%arg0: i32) -> (i32, i32, i32, i32) {
    %c0_i32 = arith.constant 0 : i32
    %c0_i32_0 = arith.constant 0 : i32
    %c0_i32_1 = arith.constant 0 : i32
    %c0_i32_2 = arith.constant 0 : i32
    return %arg0, %c0_i32, %c0_i32_0, %c0_i32_1 : i32, i32, i32, i32
  }
}

</mosaic_0001>

<llo_original>
// kernel: tpu_custom_call.1
$region0: #{tpu_custom_call.1}
  #allocation0 [shape = 'u32[]', space=smem, size = 0x4, offset = 0x4, fixed_abs, tag = 'smem constant byte address 0x4 - core index']
  #allocation1 [shape = 'u32[144,128]{1,0:T(1,128)}', space=vmem, size = 0x12000, scoped, tag = 'internal scratch']
  %s0 = inlined_call_operand.hbm [shape: f32[2,3,16,20], index: 0, kind: input, shape index: {}]
  %s1 = inlined_call_operand.hbm [shape: f32[16,12], index: 1, kind: input, shape index: {}]
  %s2 = inlined_call_operand.hbm [shape: f32[12,16], index: 2, kind: input, shape index: {}]
  %s3 = inlined_call_operand.hbm [shape: f32[2,3,16,16], index: 3, kind: output, shape index: {}]
  %s4 = sld [smem:[#allocation0]]
  $region57: #{tpu_custom_call.1} parent=0
    _
  %s6 = ssub.s32 1, %s4
  %s7 = scalar_select 0, %s6, %s4
  $region1: #{tpu_custom_call.1} parent=0
    #allocation2 [shape = 'u8[49152]{0}', space=vmem, size = 0xc000, scoped, tag = 'input window, operand 0']
    #allocation3 [shape = 's32[2]{0}', space=sflag, size = 0x8, scoped, tag = 'scoped memory for tpu_custom_call.1']
    #allocation4 [shape = 's32[2]{0}', space=sflag, size = 0x8, scoped, tag = 'scoped memory for tpu_custom_call.1']
    #allocation5 [shape = 'u8[8192]{0}', space=vmem, size = 0x2000, scoped, tag = 'input window, operand 1, single buffered']
    #allocation6 [shape = 's32[1]{0}', space=sflag, size = 0x4, scoped, tag = 'scoped memory for tpu_custom_call.1']
    #allocation7 [shape = 'u8[8192]{0}', space=vmem, size = 0x2000, scoped, tag = 'input window, operand 2, single buffered']
    #allocation8 [shape = 'u8[49152]{0}', space=vmem, size = 0xc000, scoped, tag = 'output window, operand 0']
    %8 = vsyncpa [#allocation3], 0
    %s9 = scalar_lea.sflag [#allocation3], 1
    %10 = vsyncpa %s9, 0
    %11 = vsyncpa [#allocation6], 0
    %12 = vsyncpa [#allocation4], 0
    %s13 = scalar_lea.sflag [#allocation4], 1
    %14 = vsyncpa %s13, 0
    loop: start=0, step=1, limit=4
    $region2: #{tpu_custom_call.1} parent=1 // loop_pre_header
      _
    $region3: #{tpu_custom_call.1} parent=1 // loop_header
      %s16 = sphi 0, %s20
      %p17 = scmp.ge.s32.totalorder %s16, 4
      %s26 = sphi 0, %s28
      %s29 = sphi 0, %s26
      %s30 = sphi 0, %s29
      %s46 = sphi 0, %s30
      %s50 = sphi 0, %s50
      %s52 = sphi 0, %s50
      %s53 = sphi 0, %s52
      %s67 = sphi 0, %s53
      %s71 = sphi 0, %s71
      %s73 = sphi 0, %s71
      %s74 = sphi 0, %s73
      %s88 = sphi 0, %s74
      %s94 = sphi 0, %s96
      %s97 = sphi 0, %s94
      %s98 = sphi 0, %s97
      %s114 = sphi 0, %s98
    $region4: #{tpu_custom_call.1} parent=1 // loop_header_branch
      %19 = sbr.rel (%p17) target = $region8
    $region5: #{tpu_custom_call.1} parent=1 // loop_body
      %s21 = ssub.s32 %s16, 1
      %s22 = ssub.s32 %s16, 2
      %s23 = sadd.s32 %s16, 1
      %s24 = ssub.s32 %s16, %s23
      %p25 = scmp.eq.s32.totalorder %s24, 0
      %s27 = sadd.s32 %s26, 1
      %s28 = scalar_select %p25, %s26, %s27
      %p31 = pneg %p25
      %p32 = scmp.eq.s32.totalorder %s16, 1
      %p33 = por %p31, %p32
      %p34 = scmp.ne.s32.totalorder %s26, %s29
      %p35 = scmp.eq.s32.totalorder %s16, 0
      %p36 = por %p34, %p35
      %p37 = scmp.ne.s32.totalorder %s26, %s29
      %p38 = scmp.eq.s32.totalorder %s21, 1
      %p39 = por %p37, %p38
      %p40 = scmp.ne.s32.totalorder %s29, %s30
      %p41 = scmp.eq.s32.totalorder %s21, 0
      %p42 = por %p40, %p41
      %p43 = scmp.ne.s32.totalorder %s29, %s30
      %p44 = scmp.eq.s32.totalorder %s22, 1
      %p45 = por %p43, %p44
      %p47 = scmp.ne.s32.totalorder %s30, %s46
      %p48 = scmp.eq.s32.totalorder %s22, 0
      %p49 = por %p47, %p48
      %s51 = sadd.s32 %s50, 1
      %p54 = scmp.eq.s32.totalorder %s16, 1
      %p55 = scmp.ne.s32.totalorder %s50, %s52
      %p56 = scmp.eq.s32.totalorder %s16, 0
      %p57 = por %p55, %p56
      %p58 = scmp.ne.s32.totalorder %s50, %s52
      %p59 = scmp.eq.s32.totalorder %s21, 1
      %p60 = por %p58, %p59
      %p61 = scmp.ne.s32.totalorder %s52, %s53
      %p62 = scmp.eq.s32.totalorder %s21, 0
      %p63 = por %p61, %p62
      %p64 = scmp.ne.s32.totalorder %s52, %s53
      %p65 = scmp.eq.s32.totalorder %s22, 1
      %p66 = por %p64, %p65
      %p68 = scmp.ne.s32.totalorder %s53, %s67
      %p69 = scmp.eq.s32.totalorder %s22, 0
      %p70 = por %p68, %p69
      %s72 = sadd.s32 %s71, 1
      %p75 = scmp.eq.s32.totalorder %s16, 1
      %p76 = scmp.ne.s32.totalorder %s71, %s73
      %p77 = scmp.eq.s32.totalorder %s16, 0
      %p78 = por %p76, %p77
      %p79 = scmp.ne.s32.totalorder %s71, %s73
      %p80 = scmp.eq.s32.totalorder %s21, 1
      %p81 = por %p79, %p80
      %p82 = scmp.ne.s32.totalorder %s73, %s74
      %p83 = scmp.eq.s32.totalorder %s21, 0
      %p84 = por %p82, %p83
      %p85 = scmp.ne.s32.totalorder %s73, %s74
      %p86 = scmp.eq.s32.totalorder %s22, 1
      %p87 = por %p85, %p86
      %p89 = scmp.ne.s32.totalorder %s74, %s88
      %p90 = scmp.eq.s32.totalorder %s22, 0
      %p91 = por %p89, %p90
      %s92 = ssub.s32 %s16, %s23
      %p93 = scmp.eq.s32.totalorder %s92, 0
      %s95 = sadd.s32 %s94, 1
      %s96 = scalar_select %p93, %s94, %s95
      %p99 = pneg %p93
      %p100 = scmp.eq.s32.totalorder %s16, 1
      %p101 = por %p99, %p100
      %p102 = scmp.ne.s32.totalorder %s94, %s97
      %p103 = scmp.eq.s32.totalorder %s16, 0
      %p104 = por %p102, %p103
      %p105 = scmp.ne.s32.totalorder %s94, %s97
      %p106 = scmp.eq.s32.totalorder %s21, 1
      %p107 = por %p105, %p106
      %p108 = scmp.ne.s32.totalorder %s97, %s98
      %p109 = scmp.eq.s32.totalorder %s21, 0
      %p110 = por %p108, %p109
      %p111 = scmp.ne.s32.totalorder %s97, %s98
      %p112 = scmp.eq.s32.totalorder %s22, 1
      %p113 = por %p111, %p112
      %p115 = scmp.ne.s32.totalorder %s98, %s114
      %p116 = scmp.eq.s32.totalorder %s22, 0
      %p117 = por %p115, %p116
      %p118 = scmp.le.s32.totalorder 1, %s16
      %p119 = scmp.lt.s32.totalorder %s16, 3
      %p120 = pnand %p118, %p119
      %p121 = pneg %p120
      // Predicated region
      $region9: #{tpu_custom_call.1} parent=5 // pred_check
        _
      $region10: #{tpu_custom_call.1} parent=5 // pred_check_branch
        %123 = sbr.rel (%p120) target = $region12
      $region11: #{tpu_custom_call.1} parent=5 // pred_region
        %s124 = ssub.s32 %s16, 1
        // Predicated region
        $region13: #{tpu_custom_call.1} parent=11 // pred_check
          %p125 = pneg %p63
        $region14: #{tpu_custom_call.1} parent=11 // pred_check_branch
          %127 = sbr.rel (%p125) target = $region16
        $region15: #{tpu_custom_call.1} parent=11 // pred_region
          %s129 = ssub.s32 256, 256
          %130 = vsyncadd [#allocation6], %s129
          %s131 = sshll.u32 [#allocation5], 4
          %s132 = int_to_ptr.vmem [resolvable:$true] %s131
          %137 = dma.hbm_to_vmem [thread:$0]  %s1, 256, %s132, [#allocation6], 128, 128, 8
        $region16: #{tpu_custom_call.1} parent=11 // pred_fallthru
          _
        // Predicated region
        $region17: #{tpu_custom_call.1} parent=11 // pred_check
          %p138 = pneg %p84
        $region18: #{tpu_custom_call.1} parent=11 // pred_check_branch
          %140 = sbr.rel (%p138) target = $region20
        $region19: #{tpu_custom_call.1} parent=11 // pred_region
          %s142 = ssub.s32 256, 256
          %143 = vsyncadd [#allocation6], %s142
          %s144 = sshll.u32 [#allocation7], 4
          %s145 = int_to_ptr.vmem [resolvable:$true] %s144
          %150 = dma.hbm_to_vmem [thread:$0]  %s2, 256, %s145, [#allocation6], 128, 128, 8
        $region20: #{tpu_custom_call.1} parent=11 // pred_fallthru
          _
      $region12: #{tpu_custom_call.1} parent=5 // pred_fallthru
        _
      %p151 = scmp.lt.s32.totalorder %s16, 2
      // Predicated region
      $region21: #{tpu_custom_call.1} parent=5 // pred_check
        %p152 = pneg %p151
      $region22: #{tpu_custom_call.1} parent=5 // pred_check_branch
        %154 = sbr.rel (%p152) target = $region24
      $region23: #{tpu_custom_call.1} parent=5 // pred_region
        // Predicated region
        $region25: #{tpu_custom_call.1} parent=23 // pred_check
          %p155 = pneg %p36
        $region26: #{tpu_custom_call.1} parent=23 // pred_check_branch
          %157 = sbr.rel (%p155) target = $region28
        $region27: #{tpu_custom_call.1} parent=23 // pred_region
          %s158 = sand.u32 %s26, 1
          %s159 = scalar_lea.sflag [#allocation3], %s158
          %s160 = sand.u32 %s26, 1
          %s161 = smul.addr %s160, 48
          %s162 = scalar_lea.vmem [#allocation2], %s161
          %s164 = ssub.s32 768, 768
          %165 = vsyncadd %s159, %s164
          %s166 = smul.addr %s16, 6
          %s167 = smul.addr %s166, 128
          %s168 = scalar_lea.hbm %s0, %s167
          %s169 = sshll.u32 %s162, 4
          %s170 = int_to_ptr.vmem [resolvable:$true] %s169
          %175 = dma.hbm_to_vmem [thread:$0]  %s168, 768, %s170, %s159, 128, 128, 8
        $region28: #{tpu_custom_call.1} parent=23 // pred_fallthru
          _
      $region24: #{tpu_custom_call.1} parent=5 // pred_fallthru
        _
      %p176 = scmp.le.s32.totalorder 1, %s16
      %p177 = scmp.lt.s32.totalorder %s16, 3
      %p178 = pnand %p176, %p177
      %p179 = pneg %p178
      // Predicated region
      $region29: #{tpu_custom_call.1} parent=5 // pred_check
        _
      $region30: #{tpu_custom_call.1} parent=5 // pred_check_branch
        %181 = sbr.rel (%p178) target = $region32
      $region31: #{tpu_custom_call.1} parent=5 // pred_region
        %s182 = ssub.s32 %s16, 1
        %s183 = sand.u32 %s29, 1
        %s184 = scalar_lea.sflag [#allocation3], %s183
        %s185 = sand.u32 %s29, 1
        %s186 = smul.addr %s185, 48
        %s187 = scalar_lea.vmem [#allocation2], %s186
        // Predicated region
        $region33: #{tpu_custom_call.1} parent=31 // pred_check
          %p188 = pneg %p42
        $region34: #{tpu_custom_call.1} parent=31 // pred_check_branch
          %190 = sbr.rel (%p188) target = $region36
        $region35: #{tpu_custom_call.1} parent=31 // pred_region
          %191 = dma.done %s184, 768
        $region36: #{tpu_custom_call.1} parent=31 // pred_fallthru
          _
        // Predicated region
        $region37: #{tpu_custom_call.1} parent=31 // pred_check
          %p192 = pneg %p63
        $region38: #{tpu_custom_call.1} parent=31 // pred_check_branch
          %194 = sbr.rel (%p192) target = $region40
        $region39: #{tpu_custom_call.1} parent=31 // pred_region
          %195 = dma.done [#allocation6], 256
        $region40: #{tpu_custom_call.1} parent=31 // pred_fallthru
          _
        // Predicated region
        $region41: #{tpu_custom_call.1} parent=31 // pred_check
          %p196 = pneg %p84
        $region42: #{tpu_custom_call.1} parent=31 // pred_check_branch
          %198 = sbr.rel (%p196) target = $region44
        $region43: #{tpu_custom_call.1} parent=31 // pred_region
          %199 = dma.done [#allocation6], 256
        $region44: #{tpu_custom_call.1} parent=31 // pred_fallthru
          _
        %s200 = sand.u32 %s29, 1
        %s201 = scalar_lea.sflag [#allocation3], %s200
        %s202 = sand.u32 %s29, 1
        %s203 = smul.addr %s202, 48
        %s204 = scalar_lea.vmem [#allocation2], %s203
        %p205 = pneg %p42
        %p206 = pneg %p39
        %p207 = pneg %p63
        %p208 = pneg %p60
        %p209 = pneg %p84
        %p210 = pneg %p81
        %p211 = pneg %p110
        %p212 = pneg %p107
        %s213 = sand.u32 %s97, 1
        %s214 = scalar_lea.sflag [#allocation4], %s213
        %s215 = sand.u32 %s97, 1
        %s216 = smul.addr %s215, 48
        %s217 = scalar_lea.vmem [#allocation8], %s216
        %v218 = vld [vmem:[#allocation5] sm:$0xff]
        %v219 = vld [vmem:[#allocation5 + $0x8] sm:$0xff]
        %v220 = vld [vmem:[#allocation7] sm:$0xff]
        %v221 = vld [vmem:[#allocation7 + $0x8] sm:$0xf]
        %v222 = vld [vmem:[%s187] sm:$0xff]
        %v223 = vld [vmem:[%s187 + $0x8] sm:$0xff]
        %vm226 = vcmask 1045504
        %v227 = vrot.slane %v222, 2
        %v228 = vrot.slane %v223, 2
        %v229 = vsel %vm226, %v227, %v228
        %230 = vrot.lane.b32.xlu0 %v229, 124
        %v231 = vpop.permute.xlu0 %230
        %232 = vrot.lane.b32.xlu0 %v228, 124
        %v233 = vpop.permute.xlu0 %232
        %vm235 = vcmask 97280
        %v237 = vsel %vm235, %v218, 0
        %v240 = vsel %vm235, %v219, 0
        %vm242 = vcmask 1043456
        %v243 = vsel %vm242, %v233, 0
        %245 = vmatprep.subr.mxu0 0.0
        %246 = vmatpush1.msra.mxu0 %v231
        %247 = vmatprep.subr.mxu0 0.0
        %248 = vmatpush1.msra.mxu0 %v243
        %249 = vmatprep.subr.mxu0 0.0
        %250 = vmatpush1.msra.mxu0 0.0
        %251 = vmatprep.subr.mxu0 0.0
        %252 = vmatpush1.msra.mxu0 0.0
        %253 = vmatprep.subr.mxu0 0.0
        %254 = vmatpush1.msra.mxu0 0.0
        %255 = vmatprep.subr.mxu0 0.0
        %256 = vmatpush1.msra.mxu0 0.0
        %257 = vmatprep.subr.mxu0 0.0
        %258 = vmatpush1.msra.mxu0 0.0
        %259 = vmatprep.subr.mxu0 0.0
        %260 = vmatpush1.msra.mxu0 0.0
        %261 = vmatprep.subr.mxu0 0.0
        %262 = vmatpush1.msra.mxu0 0.0
        %263 = vmatprep.subr.mxu0 0.0
        %264 = vmatpush1.msra.mxu0 0.0
        %265 = vmatprep.subr.mxu0 0.0
        %266 = vmatpush1.msra.mxu0 0.0
        %267 = vmatprep.subr.mxu0 0.0
        %268 = vmatpush1.msra.mxu0 0.0
        %269 = vmatprep.subr.mxu0 0.0
        %270 = vmatpush1.msra.mxu0 0.0
        %271 = vmatprep.subr.mxu0 0.0
        %272 = vmatpush1.msra.mxu0 0.0
        %273 = vmatprep.subr.mxu0 0.0
        %274 = vmatpush1.msra.mxu0 0.0
        %275 = vmatprep.subr.mxu0 0.0
        %276 = vmatpush1.msra.mxu0 0.0
        %277 = vmatprep.subr.mxu0 0.0
        %278 = vmatpush1.msra.mxu0 0.0
        %279 = vmatprep.subr.mxu0 0.0
        %280 = vmatpush1.msra.mxu0 0.0
        %281 = vmatprep.subr.mxu0 0.0
        %282 = vmatpush1.msra.mxu0 0.0
        %283 = vmatprep.subr.mxu0 0.0
        %284 = vmatpush1.msra.mxu0 0.0
        %285 = vmatprep.subr.mxu0 0.0
        %286 = vmatpush1.msra.mxu0 0.0
        %287 = vmatprep.subr.mxu0 0.0
        %288 = vmatpush1.msra.mxu0 0.0
        %289 = vmatprep.subr.mxu0 0.0
        %290 = vmatpush1.msra.mxu0 0.0
        %291 = vmatprep.subr.mxu0 0.0
        %292 = vmatpush1.msra.mxu0 0.0
        %293 = vmatprep.subr.mxu0 0.0
        %294 = vmatpush1.msra.mxu0 0.0
        %295 = vmatprep.subr.mxu0 0.0
        %296 = vmatpush1.msra.mxu0 0.0
        %297 = vmatprep.subr.mxu0 0.0
        %298 = vmatpush1.msra.mxu0 0.0
        %299 = vmatprep.subr.mxu0 0.0
        %300 = vmatpush1.msra.mxu0 0.0
        %301 = vmatprep.subr.mxu0 0.0
        %302 = vmatpush1.msra.mxu0 0.0
        %303 = vmatprep.subr.mxu0 0.0
        %304 = vmatpush1.msra.mxu0 0.0
        %305 = vmatprep.subr.mxu0 0.0
        %306 = vmatpush1.msra.mxu0 0.0
        %307 = vmatprep.subr.mxu0 0.0
        %308 = vmatpush1.msra.mxu0 0.0
        %309 = vmatprep.mubr.f32.mxu0 0.0
        %310 = vmatmul.mubr.f32.gmra.mrb[0].mxu0 %v237
        %v311 = vpop.f32.mrb[0].mxu0
        %v312 = vadd.f32 0.0, %v311
        %v313 = vpop.f32.mrb[0].mxu0
        %314 = vmatprep.mubr.f32.mxu0 0.0
        %315 = vmatmul.mubr.f32.gmra.mrb[0].mxu0 %v240
        %v316 = vpop.f32.mrb[0].mxu0
        %v317 = vadd.f32 0.0, %v316
        %v318 = vpop.f32.mrb[0].mxu0
        %319 = vdwg.mxu0
        %s320 = scalar_lea.vmem %s187, 16 [#allocation2]
        %v321 = vld [vmem:[%s320] sm:$0xff]
        %v322 = vld [vmem:[%s320 + $0x8] sm:$0xff]
        %v325 = vrot.slane %v321, 2
        %v326 = vrot.slane %v322, 2
        %v327 = vsel %vm226, %v325, %v326
        %328 = vrot.lane.b32.xlu0 %v327, 124
        %v329 = vpop.permute.xlu0 %328
        %330 = vrot.lane.b32.xlu0 %v326, 124
        %v331 = vpop.permute.xlu0 %330
        %v333 = vsel %vm242, %v331, 0
        %335 = vmatprep.subr.mxu0 0.0
        %336 = vmatpush1.msra.mxu0 %v329
        %337 = vmatprep.subr.mxu0 0.0
        %338 = vmatpush1.msra.mxu0 %v333
        %339 = vmatprep.subr.mxu0 0.0
        %340 = vmatpush1.msra.mxu0 0.0
        %341 = vmatprep.subr.mxu0 0.0
        %342 = vmatpush1.msra.mxu0 0.0
        %343 = vmatprep.subr.mxu0 0.0
        %344 = vmatpush1.msra.mxu0 0.0
        %345 = vmatprep.subr.mxu0 0.0
        %346 = vmatpush1.msra.mxu0 0.0
        %347 = vmatprep.subr.mxu0 0.0
        %348 = vmatpush1.msra.mxu0 0.0
        %349 = vmatprep.subr.mxu0 0.0
        %350 = vmatpush1.msra.mxu0 0.0
        %351 = vmatprep.subr.mxu0 0.0
        %352 = vmatpush1.msra.mxu0 0.0
        %353 = vmatprep.subr.mxu0 0.0
        %354 = vmatpush1.msra.mxu0 0.0
        %355 = vmatprep.subr.mxu0 0.0
        %356 = vmatpush1.msra.mxu0 0.0
        %357 = vmatprep.subr.mxu0 0.0
        %358 = vmatpush1.msra.mxu0 0.0
        %359 = vmatprep.subr.mxu0 0.0
        %360 = vmatpush1.msra.mxu0 0.0
        %361 = vmatprep.subr.mxu0 0.0
        %362 = vmatpush1.msra.mxu0 0.0
        %363 = vmatprep.subr.mxu0 0.0
        %364 = vmatpush1.msra.mxu0 0.0
        %365 = vmatprep.subr.mxu0 0.0
        %366 = vmatpush1.msra.mxu0 0.0
        %367 = vmatprep.subr.mxu0 0.0
        %368 = vmatpush1.msra.mxu0 0.0
        %369 = vmatprep.subr.mxu0 0.0
        %370 = vmatpush1.msra.mxu0 0.0
        %371 = vmatprep.subr.mxu0 0.0
        %372 = vmatpush1.msra.mxu0 0.0
        %373 = vmatprep.subr.mxu0 0.0
        %374 = vmatpush1.msra.mxu0 0.0
        %375 = vmatprep.subr.mxu0 0.0
        %376 = vmatpush1.msra.mxu0 0.0
        %377 = vmatprep.subr.mxu0 0.0
        %378 = vmatpush1.msra.mxu0 0.0
        %379 = vmatprep.subr.mxu0 0.0
        %380 = vmatpush1.msra.mxu0 0.0
        %381 = vmatprep.subr.mxu0 0.0
        %382 = vmatpush1.msra.mxu0 0.0
        %383 = vmatprep.subr.mxu0 0.0
        %384 = vmatpush1.msra.mxu0 0.0
        %385 = vmatprep.subr.mxu0 0.0
        %386 = vmatpush1.msra.mxu0 0.0
        %387 = vmatprep.subr.mxu0 0.0
        %388 = vmatpush1.msra.mxu0 0.0
        %389 = vmatprep.subr.mxu0 0.0
        %390 = vmatpush1.msra.mxu0 0.0
        %391 = vmatprep.subr.mxu0 0.0
        %392 = vmatpush1.msra.mxu0 0.0
        %393 = vmatprep.subr.mxu0 0.0
        %394 = vmatpush1.msra.mxu0 0.0
        %395 = vmatprep.subr.mxu0 0.0
        %396 = vmatpush1.msra.mxu0 0.0
        %397 = vmatprep.subr.mxu0 0.0
        %398 = vmatpush1.msra.mxu0 0.0
        %399 = vmatprep.mubr.f32.mxu0 0.0
        %400 = vmatmul.mubr.f32.gmra.mrb[0].mxu0 %v237
        %v401 = vpop.f32.mrb[0].mxu0
        %v402 = vadd.f32 0.0, %v401
        %v403 = vpop.f32.mrb[0].mxu0
        %404 = vmatprep.mubr.f32.mxu0 0.0
        %405 = vmatmul.mubr.f32.gmra.mrb[0].mxu0 %v240
        %v406 = vpop.f32.mrb[0].mxu0
        %v407 = vadd.f32 0.0, %v406
        %v408 = vpop.f32.mrb[0].mxu0
        %409 = vdwg.mxu0
        %s410 = scalar_lea.vmem %s187, 32 [#allocation2]
        %v411 = vld [vmem:[%s410] sm:$0xff]
        %v412 = vld [vmem:[%s410 + $0x8] sm:$0xff]
        %v415 = vrot.slane %v411, 2
        %v416 = vrot.slane %v412, 2
        %v417 = vsel %vm226, %v415, %v416
        %418 = vrot.lane.b32.xlu0 %v417, 124
        %v419 = vpop.permute.xlu0 %418
        %420 = vrot.lane.b32.xlu0 %v416, 124
        %v421 = vpop.permute.xlu0 %420
        %v423 = vsel %vm242, %v421, 0
        %425 = vmatprep.subr.mxu0 0.0
        %426 = vmatpush1.msra.mxu0 %v419
        %427 = vmatprep.subr.mxu0 0.0
        %428 = vmatpush1.msra.mxu0 %v423
        %429 = vmatprep.subr.mxu0 0.0
        %430 = vmatpush1.msra.mxu0 0.0
        %431 = vmatprep.subr.mxu0 0.0
        %432 = vmatpush1.msra.mxu0 0.0
        %433 = vmatprep.subr.mxu0 0.0
        %434 = vmatpush1.msra.mxu0 0.0
        %435 = vmatprep.subr.mxu0 0.0
        %436 = vmatpush1.msra.mxu0 0.0
        %437 = vmatprep.subr.mxu0 0.0
        %438 = vmatpush1.msra.mxu0 0.0
        %439 = vmatprep.subr.mxu0 0.0
        %440 = vmatpush1.msra.mxu0 0.0
        %441 = vmatprep.subr.mxu0 0.0
        %442 = vmatpush1.msra.mxu0 0.0
        %443 = vmatprep.subr.mxu0 0.0
        %444 = vmatpush1.msra.mxu0 0.0
        %445 = vmatprep.subr.mxu0 0.0
        %446 = vmatpush1.msra.mxu0 0.0
        %447 = vmatprep.subr.mxu0 0.0
        %448 = vmatpush1.msra.mxu0 0.0
        %449 = vmatprep.subr.mxu0 0.0
        %450 = vmatpush1.msra.mxu0 0.0
        %451 = vmatprep.subr.mxu0 0.0
        %452 = vmatpush1.msra.mxu0 0.0
        %453 = vmatprep.subr.mxu0 0.0
        %454 = vmatpush1.msra.mxu0 0.0
        %455 = vmatprep.subr.mxu0 0.0
        %456 = vmatpush1.msra.mxu0 0.0
        %457 = vmatprep.subr.mxu0 0.0
        %458 = vmatpush1.msra.mxu0 0.0
        %459 = vmatprep.subr.mxu0 0.0
        %460 = vmatpush1.msra.mxu0 0.0
        %461 = vmatprep.subr.mxu0 0.0
        %462 = vmatpush1.msra.mxu0 0.0
        %463 = vmatprep.subr.mxu0 0.0
        %464 = vmatpush1.msra.mxu0 0.0
        %465 = vmatprep.subr.mxu0 0.0
        %466 = vmatpush1.msra.mxu0 0.0
        %467 = vmatprep.subr.mxu0 0.0
        %468 = vmatpush1.msra.mxu0 0.0
        %469 = vmatprep.subr.mxu0 0.0
        %470 = vmatpush1.msra.mxu0 0.0
        %471 = vmatprep.subr.mxu0 0.0
        %472 = vmatpush1.msra.mxu0 0.0
        %473 = vmatprep.subr.mxu0 0.0
        %474 = vmatpush1.msra.mxu0 0.0
        %475 = vmatprep.subr.mxu0 0.0
        %476 = vmatpush1.msra.mxu0 0.0
        %477 = vmatprep.subr.mxu0 0.0
        %478 = vmatpush1.msra.mxu0 0.0
        %479 = vmatprep.subr.mxu0 0.0
        %480 = vmatpush1.msra.mxu0 0.0
        %481 = vmatprep.subr.mxu0 0.0
        %482 = vmatpush1.msra.mxu0 0.0
        %483 = vmatprep.subr.mxu0 0.0
        %484 = vmatpush1.msra.mxu0 0.0
        %485 = vmatprep.subr.mxu0 0.0
        %486 = vmatpush1.msra.mxu0 0.0
        %487 = vmatprep.subr.mxu0 0.0
        %488 = vmatpush1.msra.mxu0 0.0
        %489 = vmatprep.mubr.f32.mxu0 0.0
        %490 = vmatmul.mubr.f32.gmra.mrb[0].mxu0 %v237
        %v491 = vpop.f32.mrb[0].mxu0
        %v492 = vadd.f32 0.0, %v491
        %v493 = vpop.f32.mrb[0].mxu0
        %494 = vmatprep.mubr.f32.mxu0 0.0
        %495 = vmatmul.mubr.f32.gmra.mrb[0].mxu0 %v240
        %v496 = vpop.f32.mrb[0].mxu0
        %v497 = vadd.f32 0.0, %v496
        %v498 = vpop.f32.mrb[0].mxu0
        %499 = vdwg.mxu0
        %v501 = vsel %vm235, %v312, 0
        %v504 = vsel %vm235, %v317, 0
        %v507 = vsel %vm235, %v402, 0
        %v510 = vsel %vm235, %v407, 0
        %v513 = vsel %vm235, %v492, 0
        %v516 = vsel %vm235, %v497, 0
        %v519 = vsel %vm242, %v221, 0
        %521 = vmatprep.subr.mxu0 0.0
        %522 = vmatpush1.msra.mxu0 %v220
        %523 = vmatprep.subr.mxu0 0.0
        %524 = vmatpush1.msra.mxu0 %v519
        %525 = vmatprep.subr.mxu0 0.0
        %526 = vmatpush1.msra.mxu0 0.0
        %527 = vmatprep.subr.mxu0 0.0
        %528 = vmatpush1.msra.mxu0 0.0
        %529 = vmatprep.subr.mxu0 0.0
        %530 = vmatpush1.msra.mxu0 0.0
        %531 = vmatprep.subr.mxu0 0.0
        %532 = vmatpush1.msra.mxu0 0.0
        %533 = vmatprep.subr.mxu0 0.0
        %534 = vmatpush1.msra.mxu0 0.0
        %535 = vmatprep.subr.mxu0 0.0
        %536 = vmatpush1.msra.mxu0 0.0
        %537 = vmatprep.subr.mxu0 0.0
        %538 = vmatpush1.msra.mxu0 0.0
        %539 = vmatprep.subr.mxu0 0.0
        %540 = vmatpush1.msra.mxu0 0.0
        %541 = vmatprep.subr.mxu0 0.0
        %542 = vmatpush1.msra.mxu0 0.0
        %543 = vmatprep.subr.mxu0 0.0
        %544 = vmatpush1.msra.mxu0 0.0
        %545 = vmatprep.subr.mxu0 0.0
        %546 = vmatpush1.msra.mxu0 0.0
        %547 = vmatprep.subr.mxu0 0.0
        %548 = vmatpush1.msra.mxu0 0.0
        %549 = vmatprep.subr.mxu0 0.0
        %550 = vmatpush1.msra.mxu0 0.0
        %551 = vmatprep.subr.mxu0 0.0
        %552 = vmatpush1.msra.mxu0 0.0
        %553 = vmatprep.subr.mxu0 0.0
        %554 = vmatpush1.msra.mxu0 0.0
        %555 = vmatprep.subr.mxu0 0.0
        %556 = vmatpush1.msra.mxu0 0.0
        %557 = vmatprep.subr.mxu0 0.0
        %558 = vmatpush1.msra.mxu0 0.0
        %559 = vmatprep.subr.mxu0 0.0
        %560 = vmatpush1.msra.mxu0 0.0
        %561 = vmatprep.subr.mxu0 0.0
        %562 = vmatpush1.msra.mxu0 0.0
        %563 = vmatprep.subr.mxu0 0.0
        %564 = vmatpush1.msra.mxu0 0.0
        %565 = vmatprep.subr.mxu0 0.0
        %566 = vmatpush1.msra.mxu0 0.0
        %567 = vmatprep.subr.mxu0 0.0
        %568 = vmatpush1.msra.mxu0 0.0
        %569 = vmatprep.subr.mxu0 0.0
        %570 = vmatpush1.msra.mxu0 0.0
        %571 = vmatprep.subr.mxu0 0.0
        %572 = vmatpush1.msra.mxu0 0.0
        %573 = vmatprep.subr.mxu0 0.0
        %574 = vmatpush1.msra.mxu0 0.0
        %575 = vmatprep.subr.mxu0 0.0
        %576 = vmatpush1.msra.mxu0 0.0
        %577 = vmatprep.subr.mxu0 0.0
        %578 = vmatpush1.msra.mxu0 0.0
        %579 = vmatprep.subr.mxu0 0.0
        %580 = vmatpush1.msra.mxu0 0.0
        %581 = vmatprep.subr.mxu0 0.0
        %582 = vmatpush1.msra.mxu0 0.0
        %583 = vmatprep.subr.mxu0 0.0
        %584 = vmatpush1.msra.mxu0 0.0
        %585 = vmatprep.mubr.f32.mxu0 0.0
        %586 = vmatmul.mubr.f32.gmra.mrb[0].mxu0 %v501
        %v587 = vpop.f32.mrb[0].mxu0
        %v588 = vadd.f32 0.0, %v587
        %v589 = vpop.f32.mrb[0].mxu0
        %590 = vmatprep.mubr.f32.mxu0 0.0
        %591 = vmatmul.mubr.f32.gmra.mrb[0].mxu0 %v504
        %v592 = vpop.f32.mrb[0].mxu0
        %v593 = vadd.f32 0.0, %v592
        %v594 = vpop.f32.mrb[0].mxu0
        %595 = vmatprep.mubr.f32.mxu0 0.0
        %596 = vmatmul.mubr.f32.gmra.mrb[0].mxu0 %v507
        %v597 = vpop.f32.mrb[0].mxu0
        %v598 = vadd.f32 0.0, %v597
        %v599 = vpop.f32.mrb[0].mxu0
        %600 = vmatprep.mubr.f32.mxu0 0.0
        %601 = vmatmul.mubr.f32.gmra.mrb[0].mxu0 %v510
        %v602 = vpop.f32.mrb[0].mxu0
        %v603 = vadd.f32 0.0, %v602
        %v604 = vpop.f32.mrb[0].mxu0
        %605 = vmatprep.mubr.f32.mxu0 0.0
        %606 = vmatmul.mubr.f32.gmra.mrb[0].mxu0 %v513
        %v607 = vpop.f32.mrb[0].mxu0
        %v608 = vadd.f32 0.0, %v607
        %v609 = vpop.f32.mrb[0].mxu0
        %610 = vmatprep.mubr.f32.mxu0 0.0
        %611 = vmatmul.mubr.f32.gmra.mrb[0].mxu0 %v516
        %v612 = vpop.f32.mrb[0].mxu0
        %v613 = vadd.f32 0.0, %v612
        %v614 = vpop.f32.mrb[0].mxu0
        %615 = vdwg.mxu0
        %v616 = vmul.f32 %v588, 4.366812
        %v617 = vmul.f32 %v593, 4.366812
        %v618 = vsub.f32 %v616, 2.117904
        %v619 = vsub.f32 %v617, 2.117904
        %vm620 = vcmask 130048
        %621 = vst.msk [vmem:[%s217] sm:$0xff] %vm620, %v618
        %622 = vst.msk [vmem:[%s217 + $0x8] sm:$0xff] %vm620, %v619
        %v623 = vmul.f32 %v598, 4.464286
        %v624 = vmul.f32 %v603, 4.464286
        %v625 = vsub.f32 %v623, 2.0357144
        %v626 = vsub.f32 %v624, 2.0357144
        %s627 = scalar_lea.vmem %s217, 16 [#allocation8]
        %628 = vst.msk [vmem:[%s627] sm:$0xff] %vm620, %v625
        %629 = vst.msk [vmem:[%s627 + $0x8] sm:$0xff] %vm620, %v626
        %v630 = vmul.f32 %v608, 4.4444447
        %v631 = vmul.f32 %v613, 4.4444447
        %v632 = vsub.f32 %v630, 1.8044444
        %v633 = vsub.f32 %v631, 1.8044444
        %s634 = scalar_lea.vmem %s217, 32 [#allocation8]
        %635 = vst.msk [vmem:[%s634] sm:$0xff] %vm620, %v632
        %636 = vst.msk [vmem:[%s634 + $0x8] sm:$0xff] %vm620, %v633
        %s637 = sand.u32 %s97, 1
        %s638 = scalar_lea.sflag [#allocation4], %s637
        %s639 = sand.u32 %s97, 1
        %s640 = smul.addr %s639, 48
        %s641 = scalar_lea.vmem [#allocation8], %s640
        // Predicated region
        $region45: #{tpu_custom_call.1} parent=31 // pred_check
          %p642 = pneg %p107
        $region46: #{tpu_custom_call.1} parent=31 // pred_check_branch
          %644 = sbr.rel (%p642) target = $region48
        $region47: #{tpu_custom_call.1} parent=31 // pred_region
          %s646 = ssub.s32 768, 768
          %647 = vsyncadd %s638, %s646
          %s648 = smul.addr %s21, 6
          %s649 = smul.addr %s648, 128
          %s650 = scalar_lea.hbm %s3, %s649
          %s651 = sshll.u32 %s641, 4
          %s652 = int_to_ptr.vmem [resolvable:$true] %s651
          %657 = dma.vmem_to_hbm [thread:$0]  %s652, 768, %s650, %s638, 128, 128, 8
        $region48: #{tpu_custom_call.1} parent=31 // pred_fallthru
          _
      $region32: #{tpu_custom_call.1} parent=5 // pred_fallthru
        _
      %p658 = scmp.le.s32.totalorder 2, %s16
      // Predicated region
      $region49: #{tpu_custom_call.1} parent=5 // pred_check
        %p659 = pneg %p658
      $region50: #{tpu_custom_call.1} parent=5 // pred_check_branch
        %661 = sbr.rel (%p659) target = $region52
      $region51: #{tpu_custom_call.1} parent=5 // pred_region
        %s662 = ssub.s32 %s16, 2
        // Predicated region
        $region53: #{tpu_custom_call.1} parent=51 // pred_check
          %p663 = pneg %p113
        $region54: #{tpu_custom_call.1} parent=51 // pred_check_branch
          %665 = sbr.rel (%p663) target = $region56
        $region55: #{tpu_custom_call.1} parent=51 // pred_region
          %s666 = sand.u32 %s98, 1
          %s667 = scalar_lea.sflag [#allocation4], %s666
          %s668 = sand.u32 %s98, 1
          %s669 = smul.addr %s668, 48
          %s670 = scalar_lea.vmem [#allocation8], %s669
          %671 = dma.done %s667, 768
        $region56: #{tpu_custom_call.1} parent=51 // pred_fallthru
          _
      $region52: #{tpu_custom_call.1} parent=5 // pred_fallthru
        _
    $region6: #{tpu_custom_call.1} parent=1 // loop_footer
      %s20 = sadd.s32 1, %s16
    $region7: #{tpu_custom_call.1} parent=1 // loop_footer_branch
      %15 = sbr.rel target = $region3
    $region8: #{tpu_custom_call.1} parent=1 // loop_exit
      _
    %672 = vsyncpa [#allocation3], 1
    %s673 = scalar_lea.sflag [#allocation3], 1
    %674 = vsyncpa %s673, 1
    %675 = vsyncpa [#allocation6], 1
    %676 = vsyncpa [#allocation4], 1
    %s677 = scalar_lea.sflag [#allocation4], 1
    %678 = vsyncpa %s677, 1

</llo_original>
